<compile_context>
chip_gen: v6e
topology: v6e:2x2x1
jax: 0.10.0
libtpu: 0.0.40
codegen_flags: <defaults>
</compile_context>

<pallas_src>
import math

import jax
import jax.numpy as jnp
from jax.experimental import pallas as pl
from jax.experimental.pallas import tpu as pltpu


def _copy_kernel(x_ref, o_ref):
    # Lane-dense 2D tile copy: no reshape, no relayout inside the kernel.
    o_ref[...] = x_ref[...]


def _sublane_multiple(dtype) -> int:
    """Native sublane packing for the dtype: f32 -> 8, bf16 -> 16, int8 -> 32."""
    itemsize = jnp.dtype(dtype).itemsize
    return max(8, 32 // max(itemsize, 1))


def _choose_copy_view(total: int, sub: int) -> tuple[int, int]:
    """Pick a (rows, cols) view of a contiguous buffer of `total` elements with
    cols a multiple of 128 (full lanes) and rows a multiple of the sublane
    packing when possible."""
    best = None
    for c in (4096, 2048, 1024, 512, 256, 128):
        if total % c == 0:
            r = total // c
            if r % sub == 0:
                return r, c            # lane-dense AND full sublane packing
            if best is None:
                best = (r, c)          # lane-dense, partial sublanes: fallback
    if best is not None:
        return best
    return 1, total                    # not 128-divisible: single full-row view


def _choose_block_rows(rows: int, cols: int, itemsize: int, sub: int,
                       max_block_bytes: int = 4 * 1024 * 1024) -> int:
    """Largest row tile that (a) divides `rows`, (b) is a multiple of the
    dtype sublane packing, and (c) keeps the block under `max_block_bytes`
    so double-buffered in/out blocks fit the scoped-VMEM limit."""
    if rows % sub != 0:
        return rows                    # block == full dim is always legal
    q = rows // sub
    row_bytes = cols * itemsize
    best = sub
    d = 1
    while d * d <= q:                  # enumerate divisors of q in O(sqrt(q))
        if q % d == 0:
            for cand in (d, q // d):
                br = cand * sub
                if br * row_bytes <= max_block_bytes and br > best:
                    best = br
        d += 1
    return best


def flatten(x: jax.Array) -> jax.Array:
    """Pallas equivalent of torch Flatten: (N, d1, d2, ...) -> (N, prod(d_i))."""
    n = x.shape[0]
    feat = math.prod(x.shape[1:]) if x.ndim > 1 else 1
    total = n * feat
    itemsize = jnp.dtype(x.dtype).itemsize
    sub = _sublane_multiple(x.dtype)

    # Free, metadata-only reshape to the lane-dense copy view (row-major
    # contiguous, so element order is identical to torch .view semantics).
    rows, cols = _choose_copy_view(total, sub)
    x2 = x.reshape(rows, cols)

    block_rows = _choose_block_rows(rows, cols, itemsize, sub)
    grid = (rows // block_rows,)

    out2 = pl.pallas_call(
        _copy_kernel,
        out_shape=jax.ShapeDtypeStruct((rows, cols), x.dtype),
        grid=grid,
        in_specs=[pl.BlockSpec((block_rows, cols), lambda i: (i, 0))],
        out_specs=pl.BlockSpec((block_rows, cols), lambda i: (i, 0)),
        compiler_params=pltpu.CompilerParams(
            dimension_semantics=("parallel",),
        ),
        cost_estimate=pl.CostEstimate(
            flops=0,
            transcendentals=0,
            bytes_accessed=2 * total * itemsize,
        ),
    )(x2)

    # Free metadata reshape back to the module's output shape (N, feat).
    return out2.reshape(n, feat)


if __name__ == "__main__":
    key = jax.random.PRNGKey(0)
    # Small NCHW input consistent with a conv-net feature map: (N=2, C=4, H=16, W=16)
    x = jax.random.normal(key, (2, 4, 16, 16), dtype=jnp.float32)

    out = flatten(x)
    out = jax.block_until_ready(out)

    # Sanity check against the pure-JAX reference of torch's .view(-1, prod)
    ref = x.reshape(x.shape[0], -1)
    assert out.shape == (2, 4 * 16 * 16), out.shape
    assert out.dtype == x.dtype
    assert jnp.array_equal(out, ref), "flatten mismatch vs reference"

    print("KERNEL_OK")
</pallas_src>

<mosaic_0001>
module attributes {stable_mosaic.version = 11 : i64} {
  func.func @_copy_kernel(%arg0: i32, %arg1: memref<8x256xf32, #tpu.memory_space<vmem>>, %arg2: memref<8x256xf32, #tpu.memory_space<vmem>>) attributes {dimension_semantics = [#tpu.dimension_semantics<parallel>], iteration_bounds = array<i64: 1>, scalar_prefetch = 0 : i64, scratch_operands = 0 : i64, tpu.core_type = #tpu.core_type<tc>, window_params = [{transform_indices = @transform_0, window_bounds = array<i64: 8, 256>}, {transform_indices = @transform_1, window_bounds = array<i64: 8, 256>}]} {
    %c0 = arith.constant 0 : index
    %c0_0 = arith.constant 0 : index
    %0 = vector.load %arg1[%c0, %c0_0] : memref<8x256xf32, #tpu.memory_space<vmem>>, vector<8x256xf32>
    %c0_1 = arith.constant 0 : index
    %c0_2 = arith.constant 0 : index
    %1 = vector.load %arg2[%c0_1, %c0_2] : memref<8x256xf32, #tpu.memory_space<vmem>>, vector<8x256xf32>
    tpu.vector_store %arg2[%c0_1, %c0_2], %0 {strides = array<i32>} : memref<8x256xf32, #tpu.memory_space<vmem>>, vector<8x256xf32>,
    return
  }
  func.func @transform_0(%arg0: i32) -> (i32, i32) {
    %c0_i32 = arith.constant 0 : i32
    %c0_i32_0 = arith.constant 0 : i32
    return %arg0, %c0_i32 : i32, i32
  }
  func.func @transform_1(%arg0: i32) -> (i32, i32) {
    %c0_i32 = arith.constant 0 : i32
    %c0_i32_0 = arith.constant 0 : i32
    return %arg0, %c0_i32 : i32, i32
  }
}

</mosaic_0001>

<llo_original>
// kernel: tpu_custom_call.1
$region0: #{tpu_custom_call.1}
  #allocation0 [shape = 'u32[]', space=smem, size = 0x4, offset = 0x4, fixed_abs, tag = 'smem constant byte address 0x4 - core index']
  #allocation1 [shape = 'u32[144,128]{1,0:T(1,128)}', space=vmem, size = 0x12000, scoped, tag = 'internal scratch']
  %s0 = inlined_call_operand.hbm [shape: f32[8,256], index: 0, kind: input, shape index: {}]
  %s1 = inlined_call_operand.hbm [shape: f32[8,256], index: 1, kind: output, shape index: {}]
  %s2 = sld [smem:[#allocation0]]
  $region18: #{tpu_custom_call.1} parent=0
    _
  %s4 = ssub.s32 1, %s2
  %s5 = scalar_select 0, %s4, %s2
  $region1: #{tpu_custom_call.1} parent=0
    #allocation2 [shape = 'u8[8192]{0}', space=vmem, size = 0x2000, scoped, tag = 'input window, operand 0, single buffered']
    #allocation3 [shape = 's32[1]{0}', space=sflag, size = 0x4, scoped, tag = 'scoped memory for tpu_custom_call.1']
    #allocation4 [shape = 's32[1]{0}', space=sflag, size = 0x4, scoped, tag = 'scoped memory for tpu_custom_call.1']
    #allocation5 [shape = 'u8[8192]{0}', space=vmem, size = 0x2000, scoped, tag = 'output window, operand 0, single buffered']
    %6 = vsyncpa [#allocation3], 0
    %7 = vsyncpa [#allocation4], 0
    // Predicated region
    $region2: #{tpu_custom_call.1} parent=1 // pred_check
      _
    $region3: #{tpu_custom_call.1} parent=1 // pred_check_branch
      %9 = sbr.rel (0) target = $region5
    $region4: #{tpu_custom_call.1} parent=1 // pred_region
      %s11 = ssub.s32 256, 256
      %12 = vsyncadd [#allocation3], %s11
      %s14 = sshll.u32 [#allocation2], 4
      %s15 = int_to_ptr.vmem [resolvable:$true] %s14
      %17 = dma.hbm_to_vmem [thread:$0]  %s0, 256, %s15, [#allocation3]
    $region5: #{tpu_custom_call.1} parent=1 // pred_fallthru
      _
    // Predicated region
    $region6: #{tpu_custom_call.1} parent=1 // pred_check
      _
    $region7: #{tpu_custom_call.1} parent=1 // pred_check_branch
      %19 = sbr.rel (0) target = $region9
    $region8: #{tpu_custom_call.1} parent=1 // pred_region
      %20 = dma.done [#allocation3], 256
    $region9: #{tpu_custom_call.1} parent=1 // pred_fallthru
      _
    %v21 = vld [vmem:[#allocation2] sm:$0xff]
    %v22 = vld [vmem:[#allocation2 + $0x8] sm:$0xff]
    %23 = vst [vmem:[#allocation5] sm:$0xff] %v21
    %24 = vst [vmem:[#allocation5 + $0x8] sm:$0xff] %v22
    // Predicated region
    $region10: #{tpu_custom_call.1} parent=1 // pred_check
      _
    $region11: #{tpu_custom_call.1} parent=1 // pred_check_branch
      %26 = sbr.rel (0) target = $region13
    $region12: #{tpu_custom_call.1} parent=1 // pred_region
      %s28 = ssub.s32 256, 256
      %29 = vsyncadd [#allocation4], %s28
      %s31 = sshll.u32 [#allocation5], 4
      %s32 = int_to_ptr.vmem [resolvable:$true] %s31
      %34 = dma.vmem_to_hbm [thread:$0]  %s32, 256, %s1, [#allocation4]
    $region13: #{tpu_custom_call.1} parent=1 // pred_fallthru
      _
    // Predicated region
    $region14: #{tpu_custom_call.1} parent=1 // pred_check
      _
    $region15: #{tpu_custom_call.1} parent=1 // pred_check_branch
      %36 = sbr.rel (0) target = $region17
    $region16: #{tpu_custom_call.1} parent=1 // pred_region
      %37 = dma.done [#allocation4], 256
    $region17: #{tpu_custom_call.1} parent=1 // pred_fallthru
      _
    %38 = vsyncpa [#allocation3], 1
    %39 = vsyncpa [#allocation4], 1

</llo_original>
